<compile_context>
chip_gen: v6e
topology: v6e:2x2x1
jax: 0.10.0
libtpu: 0.0.40
codegen_flags: <defaults>
</compile_context>

<pallas_src>
import numpy as np
import jax
import jax.numpy as jnp
from jax.experimental import pallas as pl
from jax.experimental.pallas import tpu as pltpu

EOS_TOKEN_ID = 2
PAD_TOKEN_ID = EOS_TOKEN_ID          # self.model.tokenizer.pad_token = eos_token
VOCAB = 512
HIDDEN = 32
MODEL_MAX_LENGTH = 16


# ------------------------- fused Pallas kernel -------------------------

def _mplm_fused_kernel(masks_ref, x_ref, wT_ref, xor_ref, logits_ref):
    """One launch: final-mask xor (VPU) + lm_head projection (MXU)."""
    mf = masks_ref[0]                       # (B, S) int32 full attention mask
    mm = masks_ref[1]                       # (B, S) int32 masked attention mask

    # final_mask = logical_xor(full_mask, masked_mask); robust to non-0/1 values.
    xor_ref[...] = ((mf != 0) != (mm != 0)).astype(jnp.int32)

    # logits = x (M, D) @ W^T stored lane-dense as (D, V).  bf16 operands,
    # f32 accumulation on the MXU.
    logits_ref[...] = jnp.dot(x_ref[...], wT_ref[...],
                              preferred_element_type=jnp.float32)


def mplm_fused(att_full, att_masked, x2d, lm_head_wT):
    """Returns (xor_mask (B,S) int32, logits (M,V) f32) from a single pallas_call.

    att_full / att_masked : (B, S) integer attention masks.
    x2d                   : (M, D) activations (cast to bf16 for the MXU).
    lm_head_wT            : (D, V) pre-transposed, lane-dense lm_head weight.
    """
    B, S = att_full.shape
    M, D = x2d.shape
    D_w, V = lm_head_wT.shape
    assert D == D_w

    # One stacked mask slab -> a single small input DMA instead of two.
    masks = jnp.stack([att_full.astype(jnp.int32),
                       att_masked.astype(jnp.int32)])        # (2, B, S)

    x2d = x2d.astype(jnp.bfloat16)
    w = lm_head_wT.astype(jnp.bfloat16)

    # Pad M up to a multiple of 16 (bf16 sublane packing); slice back after.
    Mp = ((M + 15) // 16) * 16
    if Mp != M:
        x2d = jnp.pad(x2d, ((0, Mp - M), (0, 0)))

    xorm, logits = pl.pallas_call(
        _mplm_fused_kernel,
        out_shape=(jax.ShapeDtypeStruct((B, S), jnp.int32),
                   jax.ShapeDtypeStruct((Mp, V), jnp.float32)),
        grid=(1,),
        in_specs=[pl.BlockSpec((2, B, S), lambda i: (0, 0, 0)),
                  pl.BlockSpec((Mp, D), lambda i: (0, 0)),
                  pl.BlockSpec((D, V), lambda i: (0, 0))],
        out_specs=(pl.BlockSpec((B, S), lambda i: (0, 0)),
                   pl.BlockSpec((Mp, V), lambda i: (0, 0))),
        compiler_params=pltpu.CompilerParams(
            dimension_semantics=("arbitrary",)),
    )(masks, x2d, w)

    return xorm, logits[:M]


# ------------------------- glue (mirrors the torch reference) -------------------------

class Graph:
    def __init__(self, num_node_feat, node_map, edge_index, edge_map):
        self.num_node_feat = num_node_feat
        self.node_map = node_map
        self.edge_index = edge_index
        self.edge_map = edge_map


def mplm_forward(data_ids, masked_ids, graph, embed_table, lm_head_wT):
    # TODO(synk): LlamaTokenizer (text -> ids) has no Pallas equivalent; inputs are
    # pre-tokenized id lists standing in for tokenizer(data)['input_ids'].
    prompt_output_full = [list(p) for p in data_ids]
    prompt_output_masked = [list(p) for p in masked_ids]
    prompt_output_masked = [
        p + [EOS_TOKEN_ID] if len(p) == len(prompt_output_full[i]) else p
        for i, p in enumerate(prompt_output_masked)
    ]
    prompt_output_full = [p + [EOS_TOKEN_ID] for p in prompt_output_full]

    prompt_output_ids_full, prompt_mask, prompt_masked_mask = [], [], []
    for i, p in enumerate(prompt_output_full):
        if len(p) < MODEL_MAX_LENGTH:
            prompt_output_id = p
            loc = len(prompt_output_masked[i])
        elif MODEL_MAX_LENGTH / 2 < len(prompt_output_masked[i]) != len(p):
            extra = len(p) - MODEL_MAX_LENGTH
            offset = min(extra, int(len(prompt_output_masked[i]) - MODEL_MAX_LENGTH / 2))
            prompt_output_id = p[offset:offset + MODEL_MAX_LENGTH]
            loc = len(prompt_output_masked[i]) - offset
        else:
            prompt_output_id = p[:MODEL_MAX_LENGTH]
            loc = min(len(prompt_output_masked[i]), MODEL_MAX_LENGTH)
        prompt_output_ids_full.append(prompt_output_id)
        prompt_mask.append([1] * len(prompt_output_id))
        prompt_masked_mask.append([1] * loc + [0] * (len(prompt_output_id) - loc))

    # tokenizer.pad(..., padding=True) — right padding with the eos/pad token.
    S = max(len(p) for p in prompt_output_ids_full)
    pad_ids = lambda p: p + [PAD_TOKEN_ID] * (S - len(p))
    pad_msk = lambda m: m + [0] * (S - len(m))
    ids = jnp.asarray([pad_ids(p) for p in prompt_output_ids_full], jnp.int32)
    att_full = jnp.asarray([pad_msk(m) for m in prompt_mask], jnp.int32)
    att_masked = jnp.asarray([pad_msk(m) for m in prompt_masked_mask], jnp.int32)

    # token_count = output_masked['attention_mask'].sum(dim=-1): in the torch
    # reference this is a CPU op on tokenizer output (before .to(device)), so
    # compute it on host — no device round trip, no (B, 1) VMEM output.
    token_count = np.array([int(sum(m)) for m in prompt_masked_mask], dtype=np.int64)

    # --- embed_tokens gather (glue), then ONE fused pallas_call for all device
    #     work (xor mask + lm_head projection).  Nothing below blocks on it. ---
    B = ids.shape[0]
    embs = jnp.take(embed_table, ids, axis=0)                         # (B, S, D) bf16
    x2d = embs.reshape(B * S, HIDDEN)
    # TODO(synk): the full MPLMSparse graph-conditioned LLaMA decoder (pretrained
    # checkpoint + LoRA) is not reproducible here; the `.logits` hot path is modelled
    # as embed_tokens -> lm_head projection on the MXU.
    xorm, logits2d = mplm_fused(att_full, att_masked, x2d, lm_head_wT)
    logits = logits2d.reshape(B, S, VOCAB)

    # --- graph bookkeeping (per-node exclusive cumsum), as in the torch loop;
    #     all host-side numpy, runs while the TPU works. ---
    node_token_count = token_count[:graph.num_node_feat]
    edge_token_count = token_count[graph.num_node_feat:][graph.edge_map]
    max_edge_token = int(edge_token_count.max())
    edge_order = np.zeros(graph.edge_index.shape[1], dtype=np.int64)
    node_order = []
    for i in range(len(graph.node_map)):
        s_target = graph.edge_index[1] == i
        s_node = graph.edge_index[0][s_target]
        t = node_token_count[s_node] + edge_token_count[s_target]
        t = np.concatenate([np.zeros(1, dtype=t.dtype), t[:-1]])
        t = np.cumsum(t)
        edge_order[s_target] = t
        node_order.append(t[-1:])
    graph.edge_order = edge_order
    graph.node_order = np.concatenate(node_order)
    graph.max_edge_token = max_edge_token

    mem_mask = att_masked[:graph.num_node_feat]                       # noqa: F841
    edge_mask = att_masked[graph.num_node_feat:, :max_edge_token]     # noqa: F841

    final_mask = xorm

    return (logits[:, :-1], ids[:, 1:], final_mask[:, 1:].astype(jnp.bool_))


# ------------------------- demo -------------------------

if __name__ == "__main__":
    key = jax.random.PRNGKey(0)
    k_emb, k_lm, k_chk = jax.random.split(key, 3)

    # Model weights are bf16 (torch_dtype=bfloat16 in the reference).
    embed_table = (jax.random.normal(k_emb, (VOCAB, HIDDEN), jnp.float32)
                   * 0.02).astype(jnp.bfloat16)
    lm_head_w = (jax.random.normal(k_lm, (VOCAB, HIDDEN), jnp.float32)
                 * 0.02).astype(jnp.bfloat16)          # nn.Linear layout (V, D)
    # One-time init-side layout change: lane-dense (D, V) copy for the MXU.
    lm_head_wT = jnp.asarray(lm_head_w.T)              # (D, V)

    # ---- real numerical cross-check of the fused kernel vs plain XLA ----
    Bc, Sc, Mc = 3, 8, 20                              # Mc not a multiple of 16 -> pad path
    ka, kb, kx = jax.random.split(k_chk, 3)
    att_f_c = (jax.random.uniform(ka, (Bc, Sc)) > 0.3).astype(jnp.int32)
    att_m_c = (jax.random.uniform(kb, (Bc, Sc)) > 0.5).astype(jnp.int32)
    x_c = (jax.random.normal(kx, (Mc, HIDDEN), jnp.float32) * 0.1).astype(jnp.bfloat16)

    xor_k, logits_k = mplm_fused(att_f_c, att_m_c, x_c, lm_head_wT)
    logits_ref = jnp.dot(x_c, lm_head_wT, preferred_element_type=jnp.float32)
    xor_ref = np.logical_xor(np.asarray(att_f_c) != 0,
                             np.asarray(att_m_c) != 0).astype(np.int32)
    jax.block_until_ready((xor_k, logits_k))
    np.testing.assert_allclose(np.asarray(logits_k), np.asarray(logits_ref),
                               rtol=1e-3, atol=1e-5)
    assert np.array_equal(np.asarray(xor_k), xor_ref)

    # ---- end-to-end forward on the toy MPLM setup ----
    # 4 "texts": the first num_node_feat=2 are node texts, the remaining 2 are edge texts.
    prompt_full = [
        [5, 17, 23, 9, 11],
        [7, 3, 31, 12, 8, 19, 6],
        [13, 4, 21, 30, 16, 25],
        [9, 14, 27, 5],
    ]
    # masked versions = prompt prefixes (the xor-ed suffix marks answer tokens).
    prompt_masked = [
        [5, 17, 23],
        [7, 3, 31, 12],
        [13, 4, 21, 30, 16, 25],   # same length as full -> gets eos appended (ref. logic)
        [9, 14],
    ]

    graph = Graph(
        num_node_feat=2,
        node_map=np.array([0, 1]),
        edge_index=np.array([[0, 1, 0],
                             [1, 0, 0]]),
        edge_map=np.array([0, 1, 1]),
    )

    logits, target_ids, final_mask = mplm_forward(
        prompt_full, prompt_masked, graph, embed_table, lm_head_wT)

    jax.block_until_ready((logits, target_ids, final_mask))
    assert logits.shape == (4, 7, VOCAB) and logits.dtype == jnp.float32
    assert target_ids.shape == (4, 7)
    assert final_mask.shape == (4, 7) and final_mask.dtype == jnp.bool_
    # host-side graph bookkeeping produced the expected shapes
    assert graph.edge_order.shape == (3,) and graph.node_order.shape == (2,)

    print("KERNEL_OK")
</pallas_src>

<mosaic_0001>
module attributes {stable_mosaic.version = 11 : i64} {
  func.func @_mplm_fused_kernel(%arg0: i32, %arg1: memref<2x3x8xi32, #tpu.memory_space<vmem>>, %arg2: memref<32x32xbf16, #tpu.memory_space<vmem>>, %arg3: memref<32x512xbf16, #tpu.memory_space<vmem>>, %arg4: memref<3x8xi32, #tpu.memory_space<vmem>>, %arg5: memref<32x512xf32, #tpu.memory_space<vmem>>) attributes {dimension_semantics = [#tpu.dimension_semantics<arbitrary>], iteration_bounds = array<i64: 1>, scalar_prefetch = 0 : i64, scratch_operands = 0 : i64, tpu.core_type = #tpu.core_type<tc>, window_params = [{pipeline_mode = #tpu.pipeline_mode<synchronous>, transform_indices = @transform_0, window_bounds = array<i64: 2, 3, 8>}, {pipeline_mode = #tpu.pipeline_mode<synchronous>, transform_indices = @transform_1, window_bounds = array<i64: 32, 32>}, {pipeline_mode = #tpu.pipeline_mode<synchronous>, transform_indices = @transform_2, window_bounds = array<i64: 32, 512>}, {pipeline_mode = #tpu.pipeline_mode<synchronous>, transform_indices = @transform_3, window_bounds = array<i64: 3, 8>}, {pipeline_mode = #tpu.pipeline_mode<synchronous>, transform_indices = @transform_4, window_bounds = array<i64: 32, 512>}]} {
    %c0 = arith.constant 0 : index
    %c0_0 = arith.constant 0 : index
    %c0_1 = arith.constant 0 : index
    %0 = vector.load %arg1[%c0, %c0_0, %c0_1] : memref<2x3x8xi32, #tpu.memory_space<vmem>>, vector<1x3x8xi32>
    %1 = vector.shape_cast %0 : vector<1x3x8xi32> to vector<3x8xi32>
    %c1 = arith.constant 1 : index
    %c0_2 = arith.constant 0 : index
    %c0_3 = arith.constant 0 : index
    %2 = vector.load %arg1[%c1, %c0_2, %c0_3] : memref<2x3x8xi32, #tpu.memory_space<vmem>>, vector<1x3x8xi32>
    %3 = vector.shape_cast %2 : vector<1x3x8xi32> to vector<3x8xi32>
    %c0_i32 = arith.constant 0 : i32
    %4 = vector.broadcast %c0_i32 : i32 to vector<3x8xi32>
    %5 = arith.cmpi ne, %1, %4 : vector<3x8xi32>
    %c0_i32_4 = arith.constant 0 : i32
    %6 = vector.broadcast %c0_i32_4 : i32 to vector<3x8xi32>
    %7 = arith.cmpi ne, %3, %6 : vector<3x8xi32>
    %8 = arith.xori %5, %7 : vector<3x8xi1>
    %9 = arith.extui %8 : vector<3x8xi1> to vector<3x8xi32>
    %c0_5 = arith.constant 0 : index
    %c0_6 = arith.constant 0 : index
    %10 = vector.load %arg4[%c0_5, %c0_6] : memref<3x8xi32, #tpu.memory_space<vmem>>, vector<3x8xi32>
    tpu.vector_store %arg4[%c0_5, %c0_6], %9 {strides = array<i32>} : memref<3x8xi32, #tpu.memory_space<vmem>>, vector<3x8xi32>,
    %c0_7 = arith.constant 0 : index
    %c0_8 = arith.constant 0 : index
    %11 = vector.load %arg2[%c0_7, %c0_8] : memref<32x32xbf16, #tpu.memory_space<vmem>>, vector<32x32xbf16>
    %c0_9 = arith.constant 0 : index
    %c0_10 = arith.constant 0 : index
    %12 = vector.load %arg3[%c0_9, %c0_10] : memref<32x512xbf16, #tpu.memory_space<vmem>>, vector<32x512xbf16>
    %cst = arith.constant dense<0.000000e+00> : vector<32x512xf32>
    %13 = tpu.matmul %11, %12, %cst {dimension_numbers = #tpu.dot_dimension_numbers<[1], [0], [0], [1], [0, 0, 1, 1], [], []>} : vector<32x32xbf16>, vector<32x512xbf16>, vector<32x512xf32> -> vector<32x512xf32>
    %c0_11 = arith.constant 0 : index
    %c0_12 = arith.constant 0 : index
    %14 = vector.load %arg5[%c0_11, %c0_12] : memref<32x512xf32, #tpu.memory_space<vmem>>, vector<32x512xf32>
    tpu.vector_store %arg5[%c0_11, %c0_12], %13 {strides = array<i32>} : memref<32x512xf32, #tpu.memory_space<vmem>>, vector<32x512xf32>,
    return
  }
  func.func @transform_0(%arg0: i32) -> (i32, i32, i32) {
    %c0_i32 = arith.constant 0 : i32
    %c0_i32_0 = arith.constant 0 : i32
    %c0_i32_1 = arith.constant 0 : i32
    %c0_i32_2 = arith.constant 0 : i32
    return %c0_i32, %c0_i32_0, %c0_i32_1 : i32, i32, i32
  }
  func.func @transform_1(%arg0: i32) -> (i32, i32) {
    %c0_i32 = arith.constant 0 : i32
    %c0_i32_0 = arith.constant 0 : i32
    %c0_i32_1 = arith.constant 0 : i32
    return %c0_i32, %c0_i32_0 : i32, i32
  }
  func.func @transform_2(%arg0: i32) -> (i32, i32) {
    %c0_i32 = arith.constant 0 : i32
    %c0_i32_0 = arith.constant 0 : i32
    %c0_i32_1 = arith.constant 0 : i32
    return %c0_i32, %c0_i32_0 : i32, i32
  }
  func.func @transform_3(%arg0: i32) -> (i32, i32) {
    %c0_i32 = arith.constant 0 : i32
    %c0_i32_0 = arith.constant 0 : i32
    %c0_i32_1 = arith.constant 0 : i32
    return %c0_i32, %c0_i32_0 : i32, i32
  }
  func.func @transform_4(%arg0: i32) -> (i32, i32) {
    %c0_i32 = arith.constant 0 : i32
    %c0_i32_0 = arith.constant 0 : i32
    %c0_i32_1 = arith.constant 0 : i32
    return %c0_i32, %c0_i32_0 : i32, i32
  }
}

</mosaic_0001>

<llo_original>
// kernel: tpu_custom_call.1
$region0: #{tpu_custom_call.1}
  #allocation0 [shape = 'u32[]', space=smem, size = 0x4, offset = 0x4, fixed_abs, tag = 'smem constant byte address 0x4 - core index']
  #allocation1 [shape = 'u32[144,128]{1,0:T(1,128)}', space=vmem, size = 0x12000, scoped, tag = 'internal scratch']
  %s0 = inlined_call_operand.vmem [shape: s32[2,3,8], index: 0, kind: input, shape index: {}]
  %s1 = inlined_call_operand.hbm [shape: bf16[32,32], index: 1, kind: input, shape index: {}]
  %s2 = inlined_call_operand.hbm [shape: bf16[32,512], index: 2, kind: input, shape index: {}]
  %s3 = inlined_call_operand.hbm [shape: s32[3,8], index: 3, kind: output, shape index: {0}]
  %s4 = inlined_call_operand.hbm [shape: f32[32,512], index: 4, kind: output, shape index: {1}]
  %5 = xla_tuple %s3, %s4
  %s6 = sld [smem:[#allocation0]]
  $region38: #{tpu_custom_call.1} parent=0
    _
  %s8 = ssub.s32 1, %s6
  %s9 = scalar_select 0, %s8, %s6
  $region1: #{tpu_custom_call.1} parent=0
    #allocation2 [shape = 'u8[8192]{0}', space=vmem, size = 0x2000, scoped, tag = 'input window, operand 1, single buffered']
    #allocation3 [shape = 's32[1]{0}', space=sflag, size = 0x4, scoped, tag = 'scoped memory for tpu_custom_call.1']
    #allocation4 [shape = 's32[1]{0}', space=sflag, size = 0x4, scoped, tag = 'scoped memory for tpu_custom_call.1']
    #allocation5 [shape = 'u8[32768]{0}', space=vmem, size = 0x8000, scoped, tag = 'input window, operand 2, single buffered']
    #allocation6 [shape = 's32[1]{0}', space=sflag, size = 0x4, scoped, tag = 'scoped memory for tpu_custom_call.1']
    #allocation7 [shape = 'u8[2048]{0}', space=vmem, size = 0x800, scoped, tag = 'output window, operand 0, single buffered']
    #allocation8 [shape = 'u8[65536]{0}', space=vmem, size = 0x10000, scoped, tag = 'output window, operand 1, single buffered']
    #allocation9 [shape = 's32[1]{0}', space=sflag, size = 0x4, scoped, tag = 'scoped memory for tpu_custom_call.1']
    %10 = vsyncpa [#allocation3], 0
    %11 = vsyncpa [#allocation6], 0
    %12 = vsyncpa [#allocation4], 0
    %13 = vsyncpa [#allocation9], 0
    // Predicated region
    $region2: #{tpu_custom_call.1} parent=1 // pred_check
      _
    $region3: #{tpu_custom_call.1} parent=1 // pred_check_branch
      %15 = sbr.rel (0) target = $region5
    $region4: #{tpu_custom_call.1} parent=1 // pred_region
      _
    $region5: #{tpu_custom_call.1} parent=1 // pred_fallthru
      _
    // Predicated region
    $region6: #{tpu_custom_call.1} parent=1 // pred_check
      _
    $region7: #{tpu_custom_call.1} parent=1 // pred_check_branch
      %17 = sbr.rel (0) target = $region9
    $region8: #{tpu_custom_call.1} parent=1 // pred_region
      %s19 = ssub.s32 256, 256
      %20 = vsyncadd [#allocation3], %s19
      %s21 = sshll.u32 [#allocation2], 4
      %s22 = int_to_ptr.vmem [resolvable:$true] %s21
      %27 = dma.hbm_to_vmem [thread:$0]  %s1, 256, %s22, [#allocation3], 64, 64, 4
    $region9: #{tpu_custom_call.1} parent=1 // pred_fallthru
      _
    // Predicated region
    $region10: #{tpu_custom_call.1} parent=1 // pred_check
      _
    $region11: #{tpu_custom_call.1} parent=1 // pred_check_branch
      %29 = sbr.rel (0) target = $region13
    $region12: #{tpu_custom_call.1} parent=1 // pred_region
      %s31 = ssub.s32 1024, 1024
      %32 = vsyncadd [#allocation6], %s31
      %s33 = sshll.u32 [#allocation5], 4
      %s34 = int_to_ptr.vmem [resolvable:$true] %s33
      %39 = dma.hbm_to_vmem [thread:$0]  %s2, 1024, %s34, [#allocation6], 256, 256, 16
    $region13: #{tpu_custom_call.1} parent=1 // pred_fallthru
      _
    // Predicated region
    $region14: #{tpu_custom_call.1} parent=1 // pred_check
      _
    $region15: #{tpu_custom_call.1} parent=1 // pred_check_branch
      %41 = sbr.rel (0) target = $region17
    $region16: #{tpu_custom_call.1} parent=1 // pred_region
      %42 = dma.done [#allocation3], 256
    $region17: #{tpu_custom_call.1} parent=1 // pred_fallthru
      _
    // Predicated region
    $region18: #{tpu_custom_call.1} parent=1 // pred_check
      _
    $region19: #{tpu_custom_call.1} parent=1 // pred_check_branch
      %44 = sbr.rel (0) target = $region21
    $region20: #{tpu_custom_call.1} parent=1 // pred_region
      %45 = dma.done [#allocation6], 1024
    $region21: #{tpu_custom_call.1} parent=1 // pred_fallthru
      _
    %v47 = vld [vmem:[%s0] sm:$0x7]
    %s48 = scalar_lea.vmem %s0, 4
    %v49 = vld [vmem:[%s48] sm:$0x7]
    %vm50 = vcmp.ne.s32.totalorder %v47, 0
    %vm51 = vcmp.ne.s32.totalorder %v49, 0
    %vm52 = vmxor %vm50, %vm51
    %v53 = vsel %vm52, 1, 0
    %vm54 = vcmask 59392
    %55 = vst.msk [vmem:[#allocation7] sm:$0x7] %vm54, %v53
    %v56 = vld [vmem:[#allocation2] sm:$0xf]
    %v57 = vld [vmem:[#allocation2 + $0x4] sm:$0xf]
    %v58 = vld [vmem:[#allocation2 + $0x8] sm:$0xf]
    %v59 = vld [vmem:[#allocation2 + $0xc] sm:$0xf]
    %v60 = vld [vmem:[#allocation5] sm:$0xff]
    %v61 = vld [vmem:[#allocation5 + $0x8] sm:$0xff]
    %v62 = vld [vmem:[#allocation5 + $0x10] sm:$0xff]
    %v63 = vld [vmem:[#allocation5 + $0x18] sm:$0xff]
    %v64 = vld [vmem:[#allocation5 + $0x20] sm:$0xff]
    %v65 = vld [vmem:[#allocation5 + $0x28] sm:$0xff]
    %v66 = vld [vmem:[#allocation5 + $0x30] sm:$0xff]
    %v67 = vld [vmem:[#allocation5 + $0x38] sm:$0xff]
    %v72 = vunpack.c.l.b16 %v56
    %v73 = vunpack.c.l.b16 %v57
    %v74 = vunpack.c.l.b16 %v58
    %v75 = vunpack.c.l.b16 %v59
    %v76 = vpack.c.b16 %v73, %v72
    %v77 = vpack.c.b16 %v75, %v74
    %v86 = vunpack.c.l.b16 %v60
    %v87 = vunpack.c.h.b16 %v60
    %v88 = vunpack.c.l.b16 %v61
    %v89 = vunpack.c.h.b16 %v61
    %v90 = vunpack.c.l.b16 %v62
    %v91 = vunpack.c.h.b16 %v62
    %v92 = vunpack.c.l.b16 %v63
    %v93 = vunpack.c.h.b16 %v63
    %v94 = vunpack.c.l.b16 %v64
    %v95 = vunpack.c.h.b16 %v64
    %v96 = vunpack.c.l.b16 %v65
    %v97 = vunpack.c.h.b16 %v65
    %v98 = vunpack.c.l.b16 %v66
    %v99 = vunpack.c.h.b16 %v66
    %v100 = vunpack.c.l.b16 %v67
    %v101 = vunpack.c.h.b16 %v67
    %v102 = vpack.c.b16 %v90, %v86
    %v103 = vpack.c.b16 %v91, %v87
    %v104 = vpack.c.b16 %v92, %v88
    %v105 = vpack.c.b16 %v93, %v89
    %v106 = vpack.c.b16 %v98, %v94
    %v107 = vpack.c.b16 %v99, %v95
    %v108 = vpack.c.b16 %v100, %v96
    %v109 = vpack.c.b16 %v101, %v97
    %vm118 = vcmask 261120
    %v120 = vsel %vm118, %v76, 0
    %v123 = vsel %vm118, %v77, 0
    %125 = vmatprep.subr.bf16.mxu0 0
    %126 = vmatpush1.bf16.msra.mxu0 0
    %127 = vmatprep.subr.bf16.mxu0 0
    %128 = vmatpush1.bf16.msra.mxu0 0
    %129 = vmatprep.subr.bf16.mxu0 0
    %130 = vmatpush1.bf16.msra.mxu0 0
    %131 = vmatprep.subr.bf16.mxu0 0
    %132 = vmatpush1.bf16.msra.mxu0 0
    %133 = vmatprep.subr.bf16.mxu0 0
    %134 = vmatpush1.bf16.msra.mxu0 0
    %135 = vmatprep.subr.bf16.mxu0 0
    %136 = vmatpush1.bf16.msra.mxu0 0
    %137 = vmatprep.subr.bf16.mxu0 %v107
    %138 = vmatpush1.bf16.msra.mxu0 %v106
    %139 = vmatprep.subr.bf16.mxu0 %v103
    %140 = vmatpush1.bf16.msra.mxu0 %v102
    %141 = vmatprep.subr.bf16.mxu0 0
    %142 = vmatpush2.bf16.msra.mxu0 0
    %143 = vmatprep.subr.bf16.mxu0 0
    %144 = vmatpush2.bf16.msra.mxu0 0
    %145 = vmatprep.subr.bf16.mxu0 0
    %146 = vmatpush2.bf16.msra.mxu0 0
    %147 = vmatprep.subr.bf16.mxu0 0
    %148 = vmatpush2.bf16.msra.mxu0 0
    %149 = vmatprep.subr.bf16.mxu0 0
    %150 = vmatpush2.bf16.msra.mxu0 0
    %151 = vmatprep.subr.bf16.mxu0 0
    %152 = vmatpush2.bf16.msra.mxu0 0
    %153 = vmatprep.subr.bf16.mxu0 0
    %154 = vmatpush2.bf16.msra.mxu0 0
    %155 = vmatprep.subr.bf16.mxu0 0
    %156 = vmatpush2.bf16.msra.mxu0 0
    %157 = vmatprep.mubr.bf16.mxu0 0
    %158 = vmatmul.mubr.bf16.gmra.mxu0 %v120
    %v159 = vpop.f32.mrf.mxu0
    %v160 = vadd.f32 0.0, %v159
    %v161 = vpop.f32.mrf.mxu0
    %v162 = vadd.f32 0.0, %v161
    %v163 = vpop.f32.mrf.mxu0
    %v164 = vadd.f32 0.0, %v163
    %v165 = vpop.f32.mrf.mxu0
    %v166 = vadd.f32 0.0, %v165
    %167 = vmatprep.mubr.bf16.mxu0 0
    %168 = vmatmul.mubr.bf16.gmra.mxu0 %v123
    %v169 = vpop.f32.mrf.mxu0
    %v170 = vadd.f32 0.0, %v169
    %v171 = vpop.f32.mrf.mxu0
    %v172 = vadd.f32 0.0, %v171
    %v173 = vpop.f32.mrf.mxu0
    %v174 = vadd.f32 0.0, %v173
    %v175 = vpop.f32.mrf.mxu0
    %v176 = vadd.f32 0.0, %v175
    %177 = vdwg.mxu0
    %178 = vmatprep.subr.bf16.mxu0 0
    %179 = vmatpush1.bf16.msra.mxu0 0
    %180 = vmatprep.subr.bf16.mxu0 0
    %181 = vmatpush1.bf16.msra.mxu0 0
    %182 = vmatprep.subr.bf16.mxu0 0
    %183 = vmatpush1.bf16.msra.mxu0 0
    %184 = vmatprep.subr.bf16.mxu0 0
    %185 = vmatpush1.bf16.msra.mxu0 0
    %186 = vmatprep.subr.bf16.mxu0 0
    %187 = vmatpush1.bf16.msra.mxu0 0
    %188 = vmatprep.subr.bf16.mxu0 0
    %189 = vmatpush1.bf16.msra.mxu0 0
    %190 = vmatprep.subr.bf16.mxu0 %v109
    %191 = vmatpush1.bf16.msra.mxu0 %v108
    %192 = vmatprep.subr.bf16.mxu0 %v105
    %193 = vmatpush1.bf16.msra.mxu0 %v104
    %194 = vmatprep.subr.bf16.mxu0 0
    %195 = vmatpush2.bf16.msra.mxu0 0
    %196 = vmatprep.subr.bf16.mxu0 0
    %197 = vmatpush2.bf16.msra.mxu0 0
    %198 = vmatprep.subr.bf16.mxu0 0
    %199 = vmatpush2.bf16.msra.mxu0 0
    %200 = vmatprep.subr.bf16.mxu0 0
    %201 = vmatpush2.bf16.msra.mxu0 0
    %202 = vmatprep.subr.bf16.mxu0 0
    %203 = vmatpush2.bf16.msra.mxu0 0
    %204 = vmatprep.subr.bf16.mxu0 0
    %205 = vmatpush2.bf16.msra.mxu0 0
    %206 = vmatprep.subr.bf16.mxu0 0
    %207 = vmatpush2.bf16.msra.mxu0 0
    %208 = vmatprep.subr.bf16.mxu0 0
    %209 = vmatpush2.bf16.msra.mxu0 0
    %210 = vmatprep.mubr.bf16.mxu0 0
    %211 = vmatmul.mubr.bf16.gmra.mxu0 %v120
    %v212 = vpop.f32.mrf.mxu0
    %v213 = vadd.f32 0.0, %v212
    %v214 = vpop.f32.mrf.mxu0
    %v215 = vadd.f32 0.0, %v214
    %v216 = vpop.f32.mrf.mxu0
    %v217 = vadd.f32 0.0, %v216
    %v218 = vpop.f32.mrf.mxu0
    %v219 = vadd.f32 0.0, %v218
    %220 = vmatprep.mubr.bf16.mxu0 0
    %221 = vmatmul.mubr.bf16.gmra.mxu0 %v123
    %v222 = vpop.f32.mrf.mxu0
    %v223 = vadd.f32 0.0, %v222
    %v224 = vpop.f32.mrf.mxu0
    %v225 = vadd.f32 0.0, %v224
    %v226 = vpop.f32.mrf.mxu0
    %v227 = vadd.f32 0.0, %v226
    %v228 = vpop.f32.mrf.mxu0
    %v229 = vadd.f32 0.0, %v228
    %230 = vdwg.mxu0
    %231 = vst [vmem:[#allocation8] sm:$0xff] %v160
    %232 = vst [vmem:[#allocation8 + $0x8] sm:$0xff] %v162
    %233 = vst [vmem:[#allocation8 + $0x10] sm:$0xff] %v213
    %234 = vst [vmem:[#allocation8 + $0x18] sm:$0xff] %v215
    %235 = vst [vmem:[#allocation8 + $0x20] sm:$0xff] %v164
    %236 = vst [vmem:[#allocation8 + $0x28] sm:$0xff] %v166
    %237 = vst [vmem:[#allocation8 + $0x30] sm:$0xff] %v217
    %238 = vst [vmem:[#allocation8 + $0x38] sm:$0xff] %v219
    %239 = vst [vmem:[#allocation8 + $0x40] sm:$0xff] %v170
    %240 = vst [vmem:[#allocation8 + $0x48] sm:$0xff] %v172
    %241 = vst [vmem:[#allocation8 + $0x50] sm:$0xff] %v223
    %242 = vst [vmem:[#allocation8 + $0x58] sm:$0xff] %v225
    %243 = vst [vmem:[#allocation8 + $0x60] sm:$0xff] %v174
    %244 = vst [vmem:[#allocation8 + $0x68] sm:$0xff] %v176
    %245 = vst [vmem:[#allocation8 + $0x70] sm:$0xff] %v227
    %246 = vst [vmem:[#allocation8 + $0x78] sm:$0xff] %v229
    // Predicated region
    $region22: #{tpu_custom_call.1} parent=1 // pred_check
      _
    $region23: #{tpu_custom_call.1} parent=1 // pred_check_branch
      %248 = sbr.rel (0) target = $region25
    $region24: #{tpu_custom_call.1} parent=1 // pred_region
      %s250 = ssub.s32 64, 64
      %251 = vsyncadd [#allocation4], %s250
      %s253 = sshll.u32 [#allocation7], 4
      %s254 = int_to_ptr.vmem [resolvable:$true] %s253
      %256 = dma.vmem_to_hbm [thread:$0]  %s254, 64, %s3, [#allocation4]
    $region25: #{tpu_custom_call.1} parent=1 // pred_fallthru
      _
    // Predicated region
    $region26: #{tpu_custom_call.1} parent=1 // pred_check
      _
    $region27: #{tpu_custom_call.1} parent=1 // pred_check_branch
      %258 = sbr.rel (0) target = $region29
    $region28: #{tpu_custom_call.1} parent=1 // pred_region
      %s260 = ssub.s32 2048, 2048
      %261 = vsyncadd [#allocation9], %s260
      %s262 = sshll.u32 [#allocation8], 4
      %s263 = int_to_ptr.vmem [resolvable:$true] %s262
      %268 = dma.vmem_to_hbm [thread:$0]  %s263, 2048, %s4, [#allocation9], 512, 512, 32
    $region29: #{tpu_custom_call.1} parent=1 // pred_fallthru
      _
    // Predicated region
    $region30: #{tpu_custom_call.1} parent=1 // pred_check
      _
    $region31: #{tpu_custom_call.1} parent=1 // pred_check_branch
      %270 = sbr.rel (0) target = $region33
    $region32: #{tpu_custom_call.1} parent=1 // pred_region
      %271 = dma.done [#allocation4], 64
    $region33: #{tpu_custom_call.1} parent=1 // pred_fallthru
      _
    // Predicated region
    $region34: #{tpu_custom_call.1} parent=1 // pred_check
      _
    $region35: #{tpu_custom_call.1} parent=1 // pred_check_branch
      %273 = sbr.rel (0) target = $region37
    $region36: #{tpu_custom_call.1} parent=1 // pred_region
      %274 = dma.done [#allocation9], 2048
    $region37: #{tpu_custom_call.1} parent=1 // pred_fallthru
      _
    %275 = vsyncpa [#allocation3], 1
    %276 = vsyncpa [#allocation6], 1
    %277 = vsyncpa [#allocation4], 1
    %278 = vsyncpa [#allocation9], 1

</llo_original>
